<compile_context>
chip_gen: v7x
topology: tpu7x:2x2x1
jax: 0.10.0
libtpu: 0.0.40
codegen_flags: <defaults>
</compile_context>

<pallas_src>
import functools

import jax
import jax.numpy as jnp
from jax.experimental import pallas as pl
from jax.experimental.pallas import tpu as pltpu

SUBLANE = 8


def _round_up(x: int, m: int) -> int:
    return (x + m - 1) // m * m


def _mlp_kernel(x_ref, w1_ref, b1_ref, w2_ref, b2_ref, w3_ref, b3_ref, o_ref):
    # Fused 3-layer MLP on one row tile. f32 MXU accumulation; ReLU on the VPU.
    x = x_ref[...]
    # layer 1: Linear + ReLU
    h = jnp.dot(x, w1_ref[...], preferred_element_type=jnp.float32) + b1_ref[...]
    h = jnp.maximum(h, 0.0)
    # layer 2: Linear + ReLU
    h = jnp.dot(h, w2_ref[...], preferred_element_type=jnp.float32) + b2_ref[...]
    h = jnp.maximum(h, 0.0)
    # output layer: Linear + Identity (out_activation=None)
    y = jnp.dot(h, w3_ref[...], preferred_element_type=jnp.float32) + b3_ref[...]
    o_ref[...] = y.astype(o_ref.dtype)


def _choose_tm(batch: int, tm: int) -> int:
    """Row tile: multiple of 8, no larger than the (sublane-rounded) batch, and small
    enough that large batches give >= 2 grid steps (v7x 2-TensorCore sharding)."""
    b8 = _round_up(batch, SUBLANE)
    tm = _round_up(max(SUBLANE, min(tm, b8)), SUBLANE)
    if b8 >= 2 * SUBLANE:
        half = _round_up(pl.cdiv(b8, 2), SUBLANE)
        tm = min(tm, half)
    return tm


@functools.partial(jax.jit, static_argnames=("tm",))
def mlp_forward(x, params, tm=2048):
    """x: [B, input_dim] float32; params: list of (w_t, b) per layer, w_t is [in, out],
    b is [1, out]."""
    (w1, b1), (w2, b2), (w3, b3) = params
    B, in_dim = x.shape
    h1 = w1.shape[1]
    h2 = w2.shape[1]
    out_dim = w3.shape[1]

    tm = _choose_tm(B, tm)
    grid = (pl.cdiv(B, tm),)

    # Weights/biases: same (full-array) block every grid step -> stay resident in VMEM,
    # no re-DMA after the first step.
    resident = lambda a: pl.BlockSpec(a.shape, lambda i: (0,) * a.ndim)

    # Advisory cost hint from the TRUE (unpadded) dims.
    flops = 2 * B * (in_dim * h1 + h1 * h2 + h2 * out_dim)
    bytes_accessed = 4 * (
        B * in_dim + B * out_dim
        + in_dim * h1 + h1 + h1 * h2 + h2 + h2 * out_dim + out_dim
    )

    return pl.pallas_call(
        _mlp_kernel,
        out_shape=jax.ShapeDtypeStruct((B, out_dim), x.dtype),
        grid=grid,
        in_specs=[
            # x: [tm, in_dim] blocks; last dim equals the full array dim (legal, and a
            # contiguous HBM region -> efficient narrow DMA, no lane padding in HBM).
            pl.BlockSpec((tm, in_dim), lambda i: (i, 0)),
            resident(w1), resident(b1),
            resident(w2), resident(b2),
            resident(w3), resident(b3),
        ],
        out_specs=pl.BlockSpec((tm, out_dim), lambda i: (i, 0)),
        compiler_params=pltpu.CompilerParams(
            dimension_semantics=("parallel",),
        ),
        cost_estimate=pl.CostEstimate(
            flops=flops, transcendentals=0, bytes_accessed=bytes_accessed
        ),
    )(x, w1, b1, w2, b2, w3, b3)


def init_mlp_params(key, input_dim, output_dim, hidden_dim=(32, 32), std=0.3):
    """Deterministic 'normal' init matching apply_weight_init(weight_init='normal').
    Weights returned already transposed to [in, out]; biases as [1, out] (done once,
    outside the jitted forward)."""
    dims_in = [input_dim] + list(hidden_dim)
    dims_out = list(hidden_dim) + [output_dim]
    params = []
    for in_d, out_d in zip(dims_in, dims_out):
        key, wk = jax.random.split(key)
        # PyTorch weight is [out, in]; store transposed [in, out] so y = x @ W_t + b.
        w_t = (jax.random.normal(wk, (out_d, in_d), dtype=jnp.float32) * std).T
        b = jnp.zeros((1, out_d), dtype=jnp.float32)
        params.append((w_t, b))
    return params


def mlp_reference(x, params):
    (w1, b1), (w2, b2), (w3, b3) = params
    h = jnp.maximum(x @ w1 + b1, 0.0)
    h = jnp.maximum(h @ w2 + b2, 0.0)
    return h @ w3 + b3


if __name__ == "__main__":
    key = jax.random.PRNGKey(0)
    input_dim, output_dim = 8, 4

    params_key, xk1, xk2 = jax.random.split(key, 3)
    params = init_mlp_params(params_key, input_dim, output_dim, hidden_dim=(32, 32))

    # Small case (matches module spec sizes): batch=2, in=8, hidden=(32,32), out=4.
    batch = 2
    x = jax.random.normal(xk1, (batch, input_dim), dtype=jnp.float32)
    out = jax.block_until_ready(mlp_forward(x, params))
    ref = mlp_reference(x, params)
    assert out.shape == (batch, output_dim)
    assert jnp.allclose(out, ref, atol=1e-5, rtol=1e-5)

    # Larger, non-divisible batch: exercises multi-step grid + partial last block.
    batch2 = 300
    x2 = jax.random.normal(xk2, (batch2, input_dim), dtype=jnp.float32)
    out2 = jax.block_until_ready(mlp_forward(x2, params, tm=128))
    ref2 = mlp_reference(x2, params)
    assert out2.shape == (batch2, output_dim)
    assert jnp.allclose(out2, ref2, atol=1e-5, rtol=1e-5)

    # Default (large) tile path.
    out3 = jax.block_until_ready(mlp_forward(x2, params))
    assert jnp.allclose(out3, ref2, atol=1e-5, rtol=1e-5)

    print("KERNEL_OK")
</pallas_src>

<mosaic_0001>
module attributes {stable_mosaic.version = 11 : i64} {
  func.func @_mlp_kernel(%arg0: i32, %arg1: memref<8x8xf32, #tpu.memory_space<vmem>>, %arg2: memref<8x32xf32, #tpu.memory_space<vmem>>, %arg3: memref<1x32xf32, #tpu.memory_space<vmem>>, %arg4: memref<32x32xf32, #tpu.memory_space<vmem>>, %arg5: memref<1x32xf32, #tpu.memory_space<vmem>>, %arg6: memref<32x4xf32, #tpu.memory_space<vmem>>, %arg7: memref<1x4xf32, #tpu.memory_space<vmem>>, %arg8: memref<8x4xf32, #tpu.memory_space<vmem>>) attributes {dimension_semantics = [#tpu.dimension_semantics<parallel>], iteration_bounds = array<i64: 1>, scalar_prefetch = 0 : i64, scratch_operands = 0 : i64, tpu.core_type = #tpu.core_type<tc>, window_params = [{transform_indices = @transform_0, window_bounds = array<i64: 8, 8>}, {pipeline_mode = #tpu.pipeline_mode<synchronous>, transform_indices = @transform_1, window_bounds = array<i64: 8, 32>}, {pipeline_mode = #tpu.pipeline_mode<synchronous>, transform_indices = @transform_2, window_bounds = array<i64: 1, 32>}, {pipeline_mode = #tpu.pipeline_mode<synchronous>, transform_indices = @transform_3, window_bounds = array<i64: 32, 32>}, {pipeline_mode = #tpu.pipeline_mode<synchronous>, transform_indices = @transform_4, window_bounds = array<i64: 1, 32>}, {pipeline_mode = #tpu.pipeline_mode<synchronous>, transform_indices = @transform_5, window_bounds = array<i64: 32, 4>}, {pipeline_mode = #tpu.pipeline_mode<synchronous>, transform_indices = @transform_6, window_bounds = array<i64: 1, 4>}, {transform_indices = @transform_7, window_bounds = array<i64: 8, 4>}]} {
    %c0 = arith.constant 0 : index
    %c0_0 = arith.constant 0 : index
    %0 = vector.load %arg1[%c0, %c0_0] : memref<8x8xf32, #tpu.memory_space<vmem>>, vector<8x8xf32>
    %c0_1 = arith.constant 0 : index
    %c0_2 = arith.constant 0 : index
    %1 = vector.load %arg2[%c0_1, %c0_2] : memref<8x32xf32, #tpu.memory_space<vmem>>, vector<8x32xf32>
    %cst = arith.constant dense<0.000000e+00> : vector<8x32xf32>
    %2 = tpu.matmul %0, %1, %cst {dimension_numbers = #tpu.dot_dimension_numbers<[1], [0], [0], [1], [0, 0, 1, 1], [], []>} : vector<8x8xf32>, vector<8x32xf32>, vector<8x32xf32> -> vector<8x32xf32>
    %c0_3 = arith.constant 0 : index
    %c0_4 = arith.constant 0 : index
    %3 = vector.load %arg3[%c0_3, %c0_4] : memref<1x32xf32, #tpu.memory_space<vmem>>, vector<1x32xf32>
    %4 = vector.broadcast %3 : vector<1x32xf32> to vector<8x32xf32>
    %5 = arith.addf %2, %4 : vector<8x32xf32>
    %cst_5 = arith.constant 0.000000e+00 : f32
    %6 = vector.broadcast %cst_5 : f32 to vector<8x32xf32>
    %7 = arith.maximumf %5, %6 : vector<8x32xf32>
    %c0_6 = arith.constant 0 : index
    %c0_7 = arith.constant 0 : index
    %8 = vector.load %arg4[%c0_6, %c0_7] : memref<32x32xf32, #tpu.memory_space<vmem>>, vector<32x32xf32>
    %cst_8 = arith.constant dense<0.000000e+00> : vector<8x32xf32>
    %9 = tpu.matmul %7, %8, %cst_8 {dimension_numbers = #tpu.dot_dimension_numbers<[1], [0], [0], [1], [0, 0, 1, 1], [], []>} : vector<8x32xf32>, vector<32x32xf32>, vector<8x32xf32> -> vector<8x32xf32>
    %c0_9 = arith.constant 0 : index
    %c0_10 = arith.constant 0 : index
    %10 = vector.load %arg5[%c0_9, %c0_10] : memref<1x32xf32, #tpu.memory_space<vmem>>, vector<1x32xf32>
    %11 = vector.broadcast %10 : vector<1x32xf32> to vector<8x32xf32>
    %12 = arith.addf %9, %11 : vector<8x32xf32>
    %cst_11 = arith.constant 0.000000e+00 : f32
    %13 = vector.broadcast %cst_11 : f32 to vector<8x32xf32>
    %14 = arith.maximumf %12, %13 : vector<8x32xf32>
    %c0_12 = arith.constant 0 : index
    %c0_13 = arith.constant 0 : index
    %15 = vector.load %arg6[%c0_12, %c0_13] : memref<32x4xf32, #tpu.memory_space<vmem>>, vector<32x4xf32>
    %cst_14 = arith.constant dense<0.000000e+00> : vector<8x4xf32>
    %16 = tpu.matmul %14, %15, %cst_14 {dimension_numbers = #tpu.dot_dimension_numbers<[1], [0], [0], [1], [0, 0, 1, 1], [], []>} : vector<8x32xf32>, vector<32x4xf32>, vector<8x4xf32> -> vector<8x4xf32>
    %c0_15 = arith.constant 0 : index
    %c0_16 = arith.constant 0 : index
    %17 = vector.load %arg7[%c0_15, %c0_16] : memref<1x4xf32, #tpu.memory_space<vmem>>, vector<1x4xf32>
    %18 = vector.broadcast %17 : vector<1x4xf32> to vector<8x4xf32>
    %19 = arith.addf %16, %18 : vector<8x4xf32>
    %c0_17 = arith.constant 0 : index
    %c0_18 = arith.constant 0 : index
    %20 = vector.load %arg8[%c0_17, %c0_18] : memref<8x4xf32, #tpu.memory_space<vmem>>, vector<8x4xf32>
    tpu.vector_store %arg8[%c0_17, %c0_18], %19 {strides = array<i32>} : memref<8x4xf32, #tpu.memory_space<vmem>>, vector<8x4xf32>,
    return
  }
  func.func @transform_0(%arg0: i32) -> (i32, i32) {
    %c0_i32 = arith.constant 0 : i32
    %c0_i32_0 = arith.constant 0 : i32
    return %arg0, %c0_i32 : i32, i32
  }
  func.func @transform_1(%arg0: i32) -> (i32, i32) {
    %c0_i32 = arith.constant 0 : i32
    %c0_i32_0 = arith.constant 0 : i32
    %c0_i32_1 = arith.constant 0 : i32
    return %c0_i32, %c0_i32_0 : i32, i32
  }
  func.func @transform_2(%arg0: i32) -> (i32, i32) {
    %c0_i32 = arith.constant 0 : i32
    %c0_i32_0 = arith.constant 0 : i32
    %c0_i32_1 = arith.constant 0 : i32
    return %c0_i32, %c0_i32_0 : i32, i32
  }
  func.func @transform_3(%arg0: i32) -> (i32, i32) {
    %c0_i32 = arith.constant 0 : i32
    %c0_i32_0 = arith.constant 0 : i32
    %c0_i32_1 = arith.constant 0 : i32
    return %c0_i32, %c0_i32_0 : i32, i32
  }
  func.func @transform_4(%arg0: i32) -> (i32, i32) {
    %c0_i32 = arith.constant 0 : i32
    %c0_i32_0 = arith.constant 0 : i32
    %c0_i32_1 = arith.constant 0 : i32
    return %c0_i32, %c0_i32_0 : i32, i32
  }
  func.func @transform_5(%arg0: i32) -> (i32, i32) {
    %c0_i32 = arith.constant 0 : i32
    %c0_i32_0 = arith.constant 0 : i32
    %c0_i32_1 = arith.constant 0 : i32
    return %c0_i32, %c0_i32_0 : i32, i32
  }
  func.func @transform_6(%arg0: i32) -> (i32, i32) {
    %c0_i32 = arith.constant 0 : i32
    %c0_i32_0 = arith.constant 0 : i32
    %c0_i32_1 = arith.constant 0 : i32
    return %c0_i32, %c0_i32_0 : i32, i32
  }
  func.func @transform_7(%arg0: i32) -> (i32, i32) {
    %c0_i32 = arith.constant 0 : i32
    %c0_i32_0 = arith.constant 0 : i32
    return %arg0, %c0_i32 : i32, i32
  }
}

</mosaic_0001>

<llo_original>
// kernel: mlp_forward.1
$region0: #{mlp_forward.1}
  #allocation0 [shape = 'u32[]', space=smem, size = 0x4, offset = 0x4, fixed_abs, tag = 'smem constant byte address 0x4 - core index']
  #allocation1 [shape = 'u32[144,128]{1,0:T(1,128)}', space=vmem, size = 0x12000, scoped, tag = 'internal scratch']
  %s0 = inlined_call_operand.vmem [shape: f32[2,8], index: 0, kind: input, shape index: {}]
  %s1 = inlined_call_operand.vmem [shape: f32[8,32], index: 1, kind: input, shape index: {}]
  %s2 = inlined_call_operand.vmem [shape: f32[1,32], index: 2, kind: input, shape index: {}]
  %s3 = inlined_call_operand.vmem [shape: f32[32,32], index: 3, kind: input, shape index: {}]
  %s4 = inlined_call_operand.vmem [shape: f32[1,32], index: 4, kind: input, shape index: {}]
  %s5 = inlined_call_operand.vmem [shape: f32[32,4], index: 5, kind: input, shape index: {}]
  %s6 = inlined_call_operand.vmem [shape: f32[1,4], index: 6, kind: input, shape index: {}]
  %s7 = inlined_call_operand.hbm [shape: f32[2,4], index: 7, kind: output, shape index: {}]
  %s8 = sld [smem:[#allocation0]]
  $region38: #{mlp_forward.1} parent=0
    _
  %s10 = ssub.s32 1, %s8
  %s11 = scalar_select 0, %s10, %s8
  $region1: #{mlp_forward.1} parent=0
    #allocation2 [shape = 'u8[4096]{0}', space=vmem, size = 0x1000, scoped, tag = 'output window, operand 0, single buffered']
    #allocation3 [shape = 's32[1]{0}', space=sflag, size = 0x4, scoped, tag = 'scoped memory for mlp_forward.1']
    %12 = vsyncpa [#allocation3], 0
    // Predicated region
    $region2: #{mlp_forward.1} parent=1 // pred_check
      _
    $region3: #{mlp_forward.1} parent=1 // pred_check_branch
      %14 = sbr.rel (0) target = $region5
    $region4: #{mlp_forward.1} parent=1 // pred_region
      _
    $region5: #{mlp_forward.1} parent=1 // pred_fallthru
      _
    // Predicated region
    $region6: #{mlp_forward.1} parent=1 // pred_check
      _
    $region7: #{mlp_forward.1} parent=1 // pred_check_branch
      %16 = sbr.rel (0) target = $region9
    $region8: #{mlp_forward.1} parent=1 // pred_region
      _
    $region9: #{mlp_forward.1} parent=1 // pred_fallthru
      _
    // Predicated region
    $region10: #{mlp_forward.1} parent=1 // pred_check
      _
    $region11: #{mlp_forward.1} parent=1 // pred_check_branch
      %18 = sbr.rel (0) target = $region13
    $region12: #{mlp_forward.1} parent=1 // pred_region
      _
    $region13: #{mlp_forward.1} parent=1 // pred_fallthru
      _
    // Predicated region
    $region14: #{mlp_forward.1} parent=1 // pred_check
      _
    $region15: #{mlp_forward.1} parent=1 // pred_check_branch
      %20 = sbr.rel (0) target = $region17
    $region16: #{mlp_forward.1} parent=1 // pred_region
      _
    $region17: #{mlp_forward.1} parent=1 // pred_fallthru
      _
    // Predicated region
    $region18: #{mlp_forward.1} parent=1 // pred_check
      _
    $region19: #{mlp_forward.1} parent=1 // pred_check_branch
      %22 = sbr.rel (0) target = $region21
    $region20: #{mlp_forward.1} parent=1 // pred_region
      _
    $region21: #{mlp_forward.1} parent=1 // pred_fallthru
      _
    // Predicated region
    $region22: #{mlp_forward.1} parent=1 // pred_check
      _
    $region23: #{mlp_forward.1} parent=1 // pred_check_branch
      %24 = sbr.rel (0) target = $region25
    $region24: #{mlp_forward.1} parent=1 // pred_region
      _
    $region25: #{mlp_forward.1} parent=1 // pred_fallthru
      _
    // Predicated region
    $region26: #{mlp_forward.1} parent=1 // pred_check
      _
    $region27: #{mlp_forward.1} parent=1 // pred_check_branch
      %26 = sbr.rel (0) target = $region29
    $region28: #{mlp_forward.1} parent=1 // pred_region
      _
    $region29: #{mlp_forward.1} parent=1 // pred_fallthru
      _
    %v27 = vld [vmem:[%s0] sm:$0xff]
    %v28 = vld [vmem:[%s1] sm:$0xff]
    %v29 = vld [vmem:[%s2] sm:$0x1]
    %v31 = vlaneseq
    %v32 = vshrl.u32 %v31, 7
    %v33 = vsub.s32 0, %v32
    %v34 = vrot.slane %v29, %v33
    %vm36 = vcmask 64512
    %v38 = vsel %vm36, %v27, 0
    %40 = vmatprep.subr.mxu0 0.0
    %41 = vmatpush1.msra.mxu0 %v28
    %42 = vmatprep.subr.mxu0 0.0
    %43 = vmatpush1.msra.mxu0 0.0
    %44 = vmatprep.subr.mxu0 0.0
    %45 = vmatpush1.msra.mxu0 0.0
    %46 = vmatprep.subr.mxu0 0.0
    %47 = vmatpush1.msra.mxu0 0.0
    %48 = vmatprep.subr.mxu0 0.0
    %49 = vmatpush1.msra.mxu0 0.0
    %50 = vmatprep.subr.mxu0 0.0
    %51 = vmatpush1.msra.mxu0 0.0
    %52 = vmatprep.subr.mxu0 0.0
    %53 = vmatpush1.msra.mxu0 0.0
    %54 = vmatprep.subr.mxu0 0.0
    %55 = vmatpush1.msra.mxu0 0.0
    %56 = vmatprep.subr.mxu0 0.0
    %57 = vmatpush1.msra.mxu0 0.0
    %58 = vmatprep.subr.mxu0 0.0
    %59 = vmatpush1.msra.mxu0 0.0
    %60 = vmatprep.subr.mxu0 0.0
    %61 = vmatpush1.msra.mxu0 0.0
    %62 = vmatprep.subr.mxu0 0.0
    %63 = vmatpush1.msra.mxu0 0.0
    %64 = vmatprep.subr.mxu0 0.0
    %65 = vmatpush1.msra.mxu0 0.0
    %66 = vmatprep.subr.mxu0 0.0
    %67 = vmatpush1.msra.mxu0 0.0
    %68 = vmatprep.subr.mxu0 0.0
    %69 = vmatpush1.msra.mxu0 0.0
    %70 = vmatprep.subr.mxu0 0.0
    %71 = vmatpush1.msra.mxu0 0.0
    %72 = vmatprep.subr.mxu0 0.0
    %73 = vmatpush1.msra.mxu0 0.0
    %74 = vmatprep.subr.mxu0 0.0
    %75 = vmatpush1.msra.mxu0 0.0
    %76 = vmatprep.subr.mxu0 0.0
    %77 = vmatpush1.msra.mxu0 0.0
    %78 = vmatprep.subr.mxu0 0.0
    %79 = vmatpush1.msra.mxu0 0.0
    %80 = vmatprep.subr.mxu0 0.0
    %81 = vmatpush1.msra.mxu0 0.0
    %82 = vmatprep.subr.mxu0 0.0
    %83 = vmatpush1.msra.mxu0 0.0
    %84 = vmatprep.subr.mxu0 0.0
    %85 = vmatpush1.msra.mxu0 0.0
    %86 = vmatprep.subr.mxu0 0.0
    %87 = vmatpush1.msra.mxu0 0.0
    %88 = vmatprep.subr.mxu0 0.0
    %89 = vmatpush1.msra.mxu0 0.0
    %90 = vmatprep.subr.mxu0 0.0
    %91 = vmatpush1.msra.mxu0 0.0
    %92 = vmatprep.subr.mxu0 0.0
    %93 = vmatpush1.msra.mxu0 0.0
    %94 = vmatprep.subr.mxu0 0.0
    %95 = vmatpush1.msra.mxu0 0.0
    %96 = vmatprep.subr.mxu0 0.0
    %97 = vmatpush1.msra.mxu0 0.0
    %98 = vmatprep.subr.mxu0 0.0
    %99 = vmatpush1.msra.mxu0 0.0
    %100 = vmatprep.subr.mxu0 0.0
    %101 = vmatpush1.msra.mxu0 0.0
    %102 = vmatprep.subr.mxu0 0.0
    %103 = vmatpush1.msra.mxu0 0.0
    %104 = vmatprep.mubr.f32.mxu0 0.0
    %105 = vmatmul.mubr.f32.gmra.mrb[0].mxu0 %v38
    %v106 = vpop.f32.mrb[0].mxu0
    %v107 = vadd.f32 %v34, %v106
    %v108 = vpop.f32.mrb[0].mxu0
    %109 = vdwg.mxu0
    %v110 = vmax.f32 %v107, 0.0
    %v111 = vld [vmem:[%s3] sm:$0xff]
    %v112 = vld [vmem:[%s3 + $0x8] sm:$0xff]
    %v113 = vld [vmem:[%s3 + $0x10] sm:$0xff]
    %v114 = vld [vmem:[%s3 + $0x18] sm:$0xff]
    %v115 = vld [vmem:[%s4] sm:$0x1]
    %v117 = vlaneseq
    %v118 = vshrl.u32 %v117, 7
    %v119 = vsub.s32 0, %v118
    %v120 = vrot.slane %v115, %v119
    %vm122 = vcmask 261120
    %v124 = vsel %vm122, %v110, 0
    %126 = vmatprep.subr.mxu0 0.0
    %127 = vmatpush1.msra.mxu0 %v111
    %128 = vmatprep.subr.mxu0 0.0
    %129 = vmatpush1.msra.mxu0 %v112
    %130 = vmatprep.subr.mxu0 0.0
    %131 = vmatpush1.msra.mxu0 %v113
    %132 = vmatprep.subr.mxu0 0.0
    %133 = vmatpush1.msra.mxu0 %v114
    %134 = vmatprep.subr.mxu0 0.0
    %135 = vmatpush1.msra.mxu0 0.0
    %136 = vmatprep.subr.mxu0 0.0
    %137 = vmatpush1.msra.mxu0 0.0
    %138 = vmatprep.subr.mxu0 0.0
    %139 = vmatpush1.msra.mxu0 0.0
    %140 = vmatprep.subr.mxu0 0.0
    %141 = vmatpush1.msra.mxu0 0.0
    %142 = vmatprep.subr.mxu0 0.0
    %143 = vmatpush1.msra.mxu0 0.0
    %144 = vmatprep.subr.mxu0 0.0
    %145 = vmatpush1.msra.mxu0 0.0
    %146 = vmatprep.subr.mxu0 0.0
    %147 = vmatpush1.msra.mxu0 0.0
    %148 = vmatprep.subr.mxu0 0.0
    %149 = vmatpush1.msra.mxu0 0.0
    %150 = vmatprep.subr.mxu0 0.0
    %151 = vmatpush1.msra.mxu0 0.0
    %152 = vmatprep.subr.mxu0 0.0
    %153 = vmatpush1.msra.mxu0 0.0
    %154 = vmatprep.subr.mxu0 0.0
    %155 = vmatpush1.msra.mxu0 0.0
    %156 = vmatprep.subr.mxu0 0.0
    %157 = vmatpush1.msra.mxu0 0.0
    %158 = vmatprep.subr.mxu0 0.0
    %159 = vmatpush1.msra.mxu0 0.0
    %160 = vmatprep.subr.mxu0 0.0
    %161 = vmatpush1.msra.mxu0 0.0
    %162 = vmatprep.subr.mxu0 0.0
    %163 = vmatpush1.msra.mxu0 0.0
    %164 = vmatprep.subr.mxu0 0.0
    %165 = vmatpush1.msra.mxu0 0.0
    %166 = vmatprep.subr.mxu0 0.0
    %167 = vmatpush1.msra.mxu0 0.0
    %168 = vmatprep.subr.mxu0 0.0
    %169 = vmatpush1.msra.mxu0 0.0
    %170 = vmatprep.subr.mxu0 0.0
    %171 = vmatpush1.msra.mxu0 0.0
    %172 = vmatprep.subr.mxu0 0.0
    %173 = vmatpush1.msra.mxu0 0.0
    %174 = vmatprep.subr.mxu0 0.0
    %175 = vmatpush1.msra.mxu0 0.0
    %176 = vmatprep.subr.mxu0 0.0
    %177 = vmatpush1.msra.mxu0 0.0
    %178 = vmatprep.subr.mxu0 0.0
    %179 = vmatpush1.msra.mxu0 0.0
    %180 = vmatprep.subr.mxu0 0.0
    %181 = vmatpush1.msra.mxu0 0.0
    %182 = vmatprep.subr.mxu0 0.0
    %183 = vmatpush1.msra.mxu0 0.0
    %184 = vmatprep.subr.mxu0 0.0
    %185 = vmatpush1.msra.mxu0 0.0
    %186 = vmatprep.subr.mxu0 0.0
    %187 = vmatpush1.msra.mxu0 0.0
    %188 = vmatprep.subr.mxu0 0.0
    %189 = vmatpush1.msra.mxu0 0.0
    %190 = vmatprep.mubr.f32.mxu0 0.0
    %191 = vmatmul.mubr.f32.gmra.mrb[0].mxu0 %v124
    %v192 = vpop.f32.mrb[0].mxu0
    %v193 = vadd.f32 %v120, %v192
    %v194 = vpop.f32.mrb[0].mxu0
    %195 = vdwg.mxu0
    %v196 = vmax.f32 %v193, 0.0
    %v197 = vld [vmem:[%s5] sm:$0xff]
    %v198 = vld [vmem:[%s5 + $0x8] sm:$0xff]
    %v199 = vld [vmem:[%s5 + $0x10] sm:$0xff]
    %v200 = vld [vmem:[%s5 + $0x18] sm:$0xff]
    %v201 = vld [vmem:[%s6] sm:$0x1]
    %v203 = vlaneseq
    %v204 = vshrl.u32 %v203, 7
    %v205 = vsub.s32 0, %v204
    %v206 = vrot.slane %v201, %v205
    %v209 = vsel %vm122, %v196, 0
    %211 = vmatprep.subr.mxu0 0.0
    %212 = vmatpush1.msra.mxu0 %v197
    %213 = vmatprep.subr.mxu0 0.0
    %214 = vmatpush1.msra.mxu0 %v198
    %215 = vmatprep.subr.mxu0 0.0
    %216 = vmatpush1.msra.mxu0 %v199
    %217 = vmatprep.subr.mxu0 0.0
    %218 = vmatpush1.msra.mxu0 %v200
    %219 = vmatprep.subr.mxu0 0.0
    %220 = vmatpush1.msra.mxu0 0.0
    %221 = vmatprep.subr.mxu0 0.0
    %222 = vmatpush1.msra.mxu0 0.0
    %223 = vmatprep.subr.mxu0 0.0
    %224 = vmatpush1.msra.mxu0 0.0
    %225 = vmatprep.subr.mxu0 0.0
    %226 = vmatpush1.msra.mxu0 0.0
    %227 = vmatprep.subr.mxu0 0.0
    %228 = vmatpush1.msra.mxu0 0.0
    %229 = vmatprep.subr.mxu0 0.0
    %230 = vmatpush1.msra.mxu0 0.0
    %231 = vmatprep.subr.mxu0 0.0
    %232 = vmatpush1.msra.mxu0 0.0
    %233 = vmatprep.subr.mxu0 0.0
    %234 = vmatpush1.msra.mxu0 0.0
    %235 = vmatprep.subr.mxu0 0.0
    %236 = vmatpush1.msra.mxu0 0.0
    %237 = vmatprep.subr.mxu0 0.0
    %238 = vmatpush1.msra.mxu0 0.0
    %239 = vmatprep.subr.mxu0 0.0
    %240 = vmatpush1.msra.mxu0 0.0
    %241 = vmatprep.subr.mxu0 0.0
    %242 = vmatpush1.msra.mxu0 0.0
    %243 = vmatprep.subr.mxu0 0.0
    %244 = vmatpush1.msra.mxu0 0.0
    %245 = vmatprep.subr.mxu0 0.0
    %246 = vmatpush1.msra.mxu0 0.0
    %247 = vmatprep.subr.mxu0 0.0
    %248 = vmatpush1.msra.mxu0 0.0
    %249 = vmatprep.subr.mxu0 0.0
    %250 = vmatpush1.msra.mxu0 0.0
    %251 = vmatprep.subr.mxu0 0.0
    %252 = vmatpush1.msra.mxu0 0.0
    %253 = vmatprep.subr.mxu0 0.0
    %254 = vmatpush1.msra.mxu0 0.0
    %255 = vmatprep.subr.mxu0 0.0
    %256 = vmatpush1.msra.mxu0 0.0
    %257 = vmatprep.subr.mxu0 0.0
    %258 = vmatpush1.msra.mxu0 0.0
    %259 = vmatprep.subr.mxu0 0.0
    %260 = vmatpush1.msra.mxu0 0.0
    %261 = vmatprep.subr.mxu0 0.0
    %262 = vmatpush1.msra.mxu0 0.0
    %263 = vmatprep.subr.mxu0 0.0
    %264 = vmatpush1.msra.mxu0 0.0
    %265 = vmatprep.subr.mxu0 0.0
    %266 = vmatpush1.msra.mxu0 0.0
    %267 = vmatprep.subr.mxu0 0.0
    %268 = vmatpush1.msra.mxu0 0.0
    %269 = vmatprep.subr.mxu0 0.0
    %270 = vmatpush1.msra.mxu0 0.0
    %271 = vmatprep.subr.mxu0 0.0
    %272 = vmatpush1.msra.mxu0 0.0
    %273 = vmatprep.subr.mxu0 0.0
    %274 = vmatpush1.msra.mxu0 0.0
    %275 = vmatprep.mubr.f32.mxu0 0.0
    %276 = vmatmul.mubr.f32.gmra.mrb[0].mxu0 %v209
    %v277 = vpop.f32.mrb[0].mxu0
    %v278 = vadd.f32 %v206, %v277
    %v279 = vpop.f32.mrb[0].mxu0
    %280 = vdwg.mxu0
    %vm281 = vcmask 31744
    %282 = vst.msk [vmem:[#allocation2] sm:$0xff] %vm281, %v278
    // Predicated region
    $region30: #{mlp_forward.1} parent=1 // pred_check
      _
    $region31: #{mlp_forward.1} parent=1 // pred_check_branch
      %284 = sbr.rel (0) target = $region33
    $region32: #{mlp_forward.1} parent=1 // pred_region
      %s286 = ssub.s32 128, 32
      %287 = vsyncadd [#allocation3], %s286
      %s288 = sshll.u32 [#allocation2], 4
      %s289 = int_to_ptr.vmem [resolvable:$true] %s288
      %294 = dma.vmem_to_hbm [thread:$0]  %s289, 32, %s7, [#allocation3], 32, 32, 2
    $region33: #{mlp_forward.1} parent=1 // pred_fallthru
      _
    // Predicated region
    $region34: #{mlp_forward.1} parent=1 // pred_check
      _
    $region35: #{mlp_forward.1} parent=1 // pred_check_branch
      %296 = sbr.rel (0) target = $region37
    $region36: #{mlp_forward.1} parent=1 // pred_region
      %297 = dma.done [#allocation3], 128
    $region37: #{mlp_forward.1} parent=1 // pred_fallthru
      _
    %298 = vsyncpa [#allocation3], 1

</llo_original>
